<compile_context>
chip_gen: v7x
topology: tpu7x:2x2x1
jax: 0.10.0
libtpu: 0.0.40
codegen_flags: <defaults>
</compile_context>

<pallas_src>
import functools
import math

import jax
import jax.numpy as jnp
from jax import lax
from jax.experimental import pallas as pl
from jax.experimental.pallas import tpu as pltpu


# ----------------------------------------------------------------------------
# Parameter setup (plain JAX glue): the sinusoidal `pe` buffer from __init__.
# ----------------------------------------------------------------------------
def compute_embeddings(num_embeddings: int, embed_dim: int) -> jnp.ndarray:
    half_dim = embed_dim // 2
    scale = math.log(10000) / (half_dim - 1)
    freqs = jnp.exp(jnp.arange(half_dim, dtype=jnp.float32) * -scale)        # (half,)
    angles = jnp.arange(num_embeddings, dtype=jnp.float32)[:, None] * freqs[None, :]
    emb = jnp.concatenate([jnp.sin(angles), jnp.cos(angles)], axis=1)        # (N, 2*half)
    emb = emb.reshape(num_embeddings, -1)
    if embed_dim % 2 == 1:
        emb = jnp.concatenate(
            [emb, jnp.zeros((num_embeddings, 1), dtype=jnp.float32)], axis=1)
    return emb


# ----------------------------------------------------------------------------
# Pallas kernel: in-VMEM row gather + pad mask for one tile of rows.
# ----------------------------------------------------------------------------
def _gather_mask_kernel(row_ids_ref, valid_ref, pe_ref, out_ref, *, rows_per_tile):
    # row_ids_ref, valid_ref : (num_rows_pad,) int32 in SMEM (scalar prefetch).
    # pe_ref                 : (max_len, d_pad) f32 — full table, resident in VMEM.
    # out_ref                : (rows_per_tile, d_pad) f32 — this step's output tile.
    base = pl.program_id(0) * rows_per_tile

    def body(i, carry):
        rid = row_ids_ref[base + i]
        keep = (valid_ref[base + i] != 0).astype(jnp.float32)   # 0.0 for padded tokens
        out_ref[pl.ds(i, 1), :] = pe_ref[pl.ds(rid, 1), :] * keep
        return carry

    lax.fori_loop(0, rows_per_tile, body, 0, unroll=True)


def positional_encoding_forward(indices: jnp.ndarray,
                                pe: jnp.ndarray,
                                pad_index: int = -100,
                                rows_per_tile: int = 8) -> jnp.ndarray:
    """indices: (B, L) int32; pe: (max_len, d_model) f32 -> (B, L, d_model) f32."""
    B, L = indices.shape
    max_len, d_model = pe.shape
    num_rows = B * L

    # ---- cheap O(B*L) int32 prework in the wrapper --------------------------
    valid = indices != pad_index
    no_pad = jnp.where(valid, indices, 0)                 # pads -> 0 for the min
    min_idx = jnp.min(no_pad, axis=1, keepdims=True)      # (B, 1)
    zc = indices - min_idx                                # zero-centered indices
    # TODO(synk): torch's pe[zc] would fault for a valid zc >= max_len; we clip
    # to max_len-1 instead (padded rows are masked to zero regardless).
    row_ids = jnp.clip(zc, 0, max_len - 1).reshape(num_rows).astype(jnp.int32)
    valid_i = valid.reshape(num_rows).astype(jnp.int32)

    # ---- pad the row count up to a multiple of rows_per_tile ----------------
    num_rows_pad = -(-num_rows // rows_per_tile) * rows_per_tile
    extra = num_rows_pad - num_rows
    if extra:
        row_ids = jnp.pad(row_ids, (0, extra))            # id 0, valid 0 -> zeroed rows
        valid_i = jnp.pad(valid_i, (0, extra))

    # ---- lane-dense layout: zero-pad d_model up to a multiple of 128 --------
    d_pad = -(-d_model // 128) * 128
    pe_padded = jnp.pad(pe.astype(jnp.float32), ((0, 0), (0, d_pad - d_model)))

    kernel = functools.partial(_gather_mask_kernel, rows_per_tile=rows_per_tile)

    out = pl.pallas_call(
        kernel,
        out_shape=jax.ShapeDtypeStruct((num_rows_pad, d_pad), jnp.float32),
        grid_spec=pltpu.PrefetchScalarGridSpec(
            num_scalar_prefetch=2,                        # row_ids, valid_i -> SMEM
            grid=(num_rows_pad // rows_per_tile,),
            in_specs=[
                # Full pe table, constant block index -> DMA'd into VMEM once.
                pl.BlockSpec((max_len, d_pad), lambda t, rid, vld: (0, 0)),
            ],
            out_specs=pl.BlockSpec((rows_per_tile, d_pad),
                                   lambda t, rid, vld: (t, 0)),
        ),
        compiler_params=pltpu.CompilerParams(
            dimension_semantics=("parallel",)),
    )(row_ids, valid_i, pe_padded)

    return out[:num_rows, :d_model].reshape(B, L, d_model)


# ----------------------------------------------------------------------------
# Plain-JAX reference (mirrors the PyTorch forward) for verification.
# ----------------------------------------------------------------------------
def reference_forward(indices, pe, pad_index=-100):
    valid = indices != pad_index
    no_pad = jnp.where(valid, indices, 0)
    min_idx = jnp.min(no_pad, axis=1, keepdims=True)
    zc = indices - min_idx
    zc_safe = jnp.clip(zc, 0, pe.shape[0] - 1)            # padded rows are masked anyway
    sliced = pe[zc_safe]
    return jnp.where(valid[..., None], sliced, 0.0)


if __name__ == "__main__":
    key = jax.random.PRNGKey(0)

    B, L = 2, 8
    d_model, max_len = 32, 64
    pad_index = -100

    # Deterministic residue indices with some padded positions.
    k1, k2 = jax.random.split(key)
    indices = jax.random.randint(k1, (B, L), minval=5, maxval=30, dtype=jnp.int32)
    pad_mask = jax.random.bernoulli(k2, p=0.25, shape=(B, L))
    indices = jnp.where(pad_mask, jnp.int32(pad_index), indices)

    pe = compute_embeddings(max_len, d_model)              # (max_len, d_model) f32

    out = positional_encoding_forward(indices, pe, pad_index=pad_index)
    out = jax.block_until_ready(out)

    ref = reference_forward(indices, pe, pad_index=pad_index)
    assert out.shape == (B, L, d_model), out.shape
    assert jnp.allclose(out, ref, atol=1e-6, rtol=1e-6), "mismatch vs reference"

    print("KERNEL_OK")
</pallas_src>

<mosaic_0001>
module attributes {stable_mosaic.version = 11 : i64} {
  func.func @_gather_mask_kernel(%arg0: i32, %arg1: memref<16xi32, #tpu.memory_space<smem>>, %arg2: memref<16xi32, #tpu.memory_space<smem>>, %arg3: memref<64x128xf32, #tpu.memory_space<vmem>>, %arg4: memref<8x128xf32, #tpu.memory_space<vmem>>) attributes {dimension_semantics = [#tpu.dimension_semantics<parallel>], iteration_bounds = array<i64: 2>, scalar_prefetch = 2 : i64, scratch_operands = 0 : i64, tpu.core_type = #tpu.core_type<tc>, window_params = [{pipeline_mode = #tpu.pipeline_mode<synchronous>, transform_indices = @transform_0, window_bounds = array<i64: 64, 128>}, {transform_indices = @transform_1, window_bounds = array<i64: 8, 128>}]} {
    %c8_i32 = arith.constant 8 : i32
    %0 = arith.muli %arg0, %c8_i32 : i32
    %c0_i32 = arith.constant 0 : i32
    %1 = arith.addi %0, %c0_i32 : i32
    %2 = arith.index_cast %1 : i32 to index
    %3 = memref.load %arg1[%2] : memref<16xi32, #tpu.memory_space<smem>>
    %4 = arith.addi %0, %c0_i32 : i32
    %5 = arith.index_cast %4 : i32 to index
    %6 = memref.load %arg2[%5] : memref<16xi32, #tpu.memory_space<smem>>
    %c0_i32_0 = arith.constant 0 : i32
    %7 = arith.cmpi ne, %6, %c0_i32_0 : i32
    %8 = arith.extui %7 : i1 to i32
    %9 = arith.sitofp %8 : i32 to f32
    %10 = arith.index_cast %3 : i32 to index
    %c0 = arith.constant 0 : index
    %11 = vector.load %arg3[%10, %c0] : memref<64x128xf32, #tpu.memory_space<vmem>>, vector<1x128xf32>
    %12 = vector.broadcast %9 : f32 to vector<1x128xf32>
    %13 = arith.mulf %11, %12 : vector<1x128xf32>
    %14 = arith.index_cast %c0_i32 : i32 to index
    %c0_1 = arith.constant 0 : index
    %15 = vector.load %arg4[%14, %c0_1] : memref<8x128xf32, #tpu.memory_space<vmem>>, vector<1x128xf32>
    tpu.vector_store %arg4[%14, %c0_1], %13 {strides = array<i32>} : memref<8x128xf32, #tpu.memory_space<vmem>>, vector<1x128xf32>,
    %c1_i32 = arith.constant 1 : i32
    %16 = arith.addi %0, %c1_i32 : i32
    %17 = arith.index_cast %16 : i32 to index
    %18 = memref.load %arg1[%17] : memref<16xi32, #tpu.memory_space<smem>>
    %19 = arith.addi %0, %c1_i32 : i32
    %20 = arith.index_cast %19 : i32 to index
    %21 = memref.load %arg2[%20] : memref<16xi32, #tpu.memory_space<smem>>
    %c0_i32_2 = arith.constant 0 : i32
    %22 = arith.cmpi ne, %21, %c0_i32_2 : i32
    %23 = arith.extui %22 : i1 to i32
    %24 = arith.sitofp %23 : i32 to f32
    %25 = arith.index_cast %18 : i32 to index
    %c0_3 = arith.constant 0 : index
    %26 = vector.load %arg3[%25, %c0_3] : memref<64x128xf32, #tpu.memory_space<vmem>>, vector<1x128xf32>
    %27 = vector.broadcast %24 : f32 to vector<1x128xf32>
    %28 = arith.mulf %26, %27 : vector<1x128xf32>
    %29 = arith.index_cast %c1_i32 : i32 to index
    %c0_4 = arith.constant 0 : index
    %30 = vector.load %arg4[%29, %c0_4] : memref<8x128xf32, #tpu.memory_space<vmem>>, vector<1x128xf32>
    tpu.vector_store %arg4[%29, %c0_4], %28 {strides = array<i32>} : memref<8x128xf32, #tpu.memory_space<vmem>>, vector<1x128xf32>,
    %c2_i32 = arith.constant 2 : i32
    %31 = arith.addi %0, %c2_i32 : i32
    %32 = arith.index_cast %31 : i32 to index
    %33 = memref.load %arg1[%32] : memref<16xi32, #tpu.memory_space<smem>>
    %34 = arith.addi %0, %c2_i32 : i32
    %35 = arith.index_cast %34 : i32 to index
    %36 = memref.load %arg2[%35] : memref<16xi32, #tpu.memory_space<smem>>
    %c0_i32_5 = arith.constant 0 : i32
    %37 = arith.cmpi ne, %36, %c0_i32_5 : i32
    %38 = arith.extui %37 : i1 to i32
    %39 = arith.sitofp %38 : i32 to f32
    %40 = arith.index_cast %33 : i32 to index
    %c0_6 = arith.constant 0 : index
    %41 = vector.load %arg3[%40, %c0_6] : memref<64x128xf32, #tpu.memory_space<vmem>>, vector<1x128xf32>
    %42 = vector.broadcast %39 : f32 to vector<1x128xf32>
    %43 = arith.mulf %41, %42 : vector<1x128xf32>
    %44 = arith.index_cast %c2_i32 : i32 to index
    %c0_7 = arith.constant 0 : index
    %45 = vector.load %arg4[%44, %c0_7] : memref<8x128xf32, #tpu.memory_space<vmem>>, vector<1x128xf32>
    tpu.vector_store %arg4[%44, %c0_7], %43 {strides = array<i32>} : memref<8x128xf32, #tpu.memory_space<vmem>>, vector<1x128xf32>,
    %c3_i32 = arith.constant 3 : i32
    %46 = arith.addi %0, %c3_i32 : i32
    %47 = arith.index_cast %46 : i32 to index
    %48 = memref.load %arg1[%47] : memref<16xi32, #tpu.memory_space<smem>>
    %49 = arith.addi %0, %c3_i32 : i32
    %50 = arith.index_cast %49 : i32 to index
    %51 = memref.load %arg2[%50] : memref<16xi32, #tpu.memory_space<smem>>
    %c0_i32_8 = arith.constant 0 : i32
    %52 = arith.cmpi ne, %51, %c0_i32_8 : i32
    %53 = arith.extui %52 : i1 to i32
    %54 = arith.sitofp %53 : i32 to f32
    %55 = arith.index_cast %48 : i32 to index
    %c0_9 = arith.constant 0 : index
    %56 = vector.load %arg3[%55, %c0_9] : memref<64x128xf32, #tpu.memory_space<vmem>>, vector<1x128xf32>
    %57 = vector.broadcast %54 : f32 to vector<1x128xf32>
    %58 = arith.mulf %56, %57 : vector<1x128xf32>
    %59 = arith.index_cast %c3_i32 : i32 to index
    %c0_10 = arith.constant 0 : index
    %60 = vector.load %arg4[%59, %c0_10] : memref<8x128xf32, #tpu.memory_space<vmem>>, vector<1x128xf32>
    tpu.vector_store %arg4[%59, %c0_10], %58 {strides = array<i32>} : memref<8x128xf32, #tpu.memory_space<vmem>>, vector<1x128xf32>,
    %c4_i32 = arith.constant 4 : i32
    %61 = arith.addi %0, %c4_i32 : i32
    %62 = arith.index_cast %61 : i32 to index
    %63 = memref.load %arg1[%62] : memref<16xi32, #tpu.memory_space<smem>>
    %64 = arith.addi %0, %c4_i32 : i32
    %65 = arith.index_cast %64 : i32 to index
    %66 = memref.load %arg2[%65] : memref<16xi32, #tpu.memory_space<smem>>
    %c0_i32_11 = arith.constant 0 : i32
    %67 = arith.cmpi ne, %66, %c0_i32_11 : i32
    %68 = arith.extui %67 : i1 to i32
    %69 = arith.sitofp %68 : i32 to f32
    %70 = arith.index_cast %63 : i32 to index
    %c0_12 = arith.constant 0 : index
    %71 = vector.load %arg3[%70, %c0_12] : memref<64x128xf32, #tpu.memory_space<vmem>>, vector<1x128xf32>
    %72 = vector.broadcast %69 : f32 to vector<1x128xf32>
    %73 = arith.mulf %71, %72 : vector<1x128xf32>
    %74 = arith.index_cast %c4_i32 : i32 to index
    %c0_13 = arith.constant 0 : index
    %75 = vector.load %arg4[%74, %c0_13] : memref<8x128xf32, #tpu.memory_space<vmem>>, vector<1x128xf32>
    tpu.vector_store %arg4[%74, %c0_13], %73 {strides = array<i32>} : memref<8x128xf32, #tpu.memory_space<vmem>>, vector<1x128xf32>,
    %c5_i32 = arith.constant 5 : i32
    %76 = arith.addi %0, %c5_i32 : i32
    %77 = arith.index_cast %76 : i32 to index
    %78 = memref.load %arg1[%77] : memref<16xi32, #tpu.memory_space<smem>>
    %79 = arith.addi %0, %c5_i32 : i32
    %80 = arith.index_cast %79 : i32 to index
    %81 = memref.load %arg2[%80] : memref<16xi32, #tpu.memory_space<smem>>
    %c0_i32_14 = arith.constant 0 : i32
    %82 = arith.cmpi ne, %81, %c0_i32_14 : i32
    %83 = arith.extui %82 : i1 to i32
    %84 = arith.sitofp %83 : i32 to f32
    %85 = arith.index_cast %78 : i32 to index
    %c0_15 = arith.constant 0 : index
    %86 = vector.load %arg3[%85, %c0_15] : memref<64x128xf32, #tpu.memory_space<vmem>>, vector<1x128xf32>
    %87 = vector.broadcast %84 : f32 to vector<1x128xf32>
    %88 = arith.mulf %86, %87 : vector<1x128xf32>
    %89 = arith.index_cast %c5_i32 : i32 to index
    %c0_16 = arith.constant 0 : index
    %90 = vector.load %arg4[%89, %c0_16] : memref<8x128xf32, #tpu.memory_space<vmem>>, vector<1x128xf32>
    tpu.vector_store %arg4[%89, %c0_16], %88 {strides = array<i32>} : memref<8x128xf32, #tpu.memory_space<vmem>>, vector<1x128xf32>,
    %c6_i32 = arith.constant 6 : i32
    %91 = arith.addi %0, %c6_i32 : i32
    %92 = arith.index_cast %91 : i32 to index
    %93 = memref.load %arg1[%92] : memref<16xi32, #tpu.memory_space<smem>>
    %94 = arith.addi %0, %c6_i32 : i32
    %95 = arith.index_cast %94 : i32 to index
    %96 = memref.load %arg2[%95] : memref<16xi32, #tpu.memory_space<smem>>
    %c0_i32_17 = arith.constant 0 : i32
    %97 = arith.cmpi ne, %96, %c0_i32_17 : i32
    %98 = arith.extui %97 : i1 to i32
    %99 = arith.sitofp %98 : i32 to f32
    %100 = arith.index_cast %93 : i32 to index
    %c0_18 = arith.constant 0 : index
    %101 = vector.load %arg3[%100, %c0_18] : memref<64x128xf32, #tpu.memory_space<vmem>>, vector<1x128xf32>
    %102 = vector.broadcast %99 : f32 to vector<1x128xf32>
    %103 = arith.mulf %101, %102 : vector<1x128xf32>
    %104 = arith.index_cast %c6_i32 : i32 to index
    %c0_19 = arith.constant 0 : index
    %105 = vector.load %arg4[%104, %c0_19] : memref<8x128xf32, #tpu.memory_space<vmem>>, vector<1x128xf32>
    tpu.vector_store %arg4[%104, %c0_19], %103 {strides = array<i32>} : memref<8x128xf32, #tpu.memory_space<vmem>>, vector<1x128xf32>,
    %c7_i32 = arith.constant 7 : i32
    %106 = arith.addi %0, %c7_i32 : i32
    %107 = arith.index_cast %106 : i32 to index
    %108 = memref.load %arg1[%107] : memref<16xi32, #tpu.memory_space<smem>>
    %109 = arith.addi %0, %c7_i32 : i32
    %110 = arith.index_cast %109 : i32 to index
    %111 = memref.load %arg2[%110] : memref<16xi32, #tpu.memory_space<smem>>
    %c0_i32_20 = arith.constant 0 : i32
    %112 = arith.cmpi ne, %111, %c0_i32_20 : i32
    %113 = arith.extui %112 : i1 to i32
    %114 = arith.sitofp %113 : i32 to f32
    %115 = arith.index_cast %108 : i32 to index
    %c0_21 = arith.constant 0 : index
    %116 = vector.load %arg3[%115, %c0_21] : memref<64x128xf32, #tpu.memory_space<vmem>>, vector<1x128xf32>
    %117 = vector.broadcast %114 : f32 to vector<1x128xf32>
    %118 = arith.mulf %116, %117 : vector<1x128xf32>
    %119 = arith.index_cast %c7_i32 : i32 to index
    %c0_22 = arith.constant 0 : index
    %120 = vector.load %arg4[%119, %c0_22] : memref<8x128xf32, #tpu.memory_space<vmem>>, vector<1x128xf32>
    tpu.vector_store %arg4[%119, %c0_22], %118 {strides = array<i32>} : memref<8x128xf32, #tpu.memory_space<vmem>>, vector<1x128xf32>,
    %c8_i32_23 = arith.constant 8 : i32
    return
  }
  func.func @transform_0(%arg0: i32, %arg1: memref<16xi32, #tpu.memory_space<smem>>, %arg2: memref<16xi32, #tpu.memory_space<smem>>) -> (i32, i32) {
    %c0_i32 = arith.constant 0 : i32
    %c0_i32_0 = arith.constant 0 : i32
    %c0_i32_1 = arith.constant 0 : i32
    return %c0_i32, %c0_i32_0 : i32, i32
  }
  func.func @transform_1(%arg0: i32, %arg1: memref<16xi32, #tpu.memory_space<smem>>, %arg2: memref<16xi32, #tpu.memory_space<smem>>) -> (i32, i32) {
    %c0_i32 = arith.constant 0 : i32
    %c0_i32_0 = arith.constant 0 : i32
    return %arg0, %c0_i32 : i32, i32
  }
}

</mosaic_0001>

<llo_original>
// kernel: tpu_custom_call.1
$region0: #{tpu_custom_call.1}
  #allocation0 [shape = 'u32[]', space=smem, size = 0x4, offset = 0x4, fixed_abs, tag = 'smem constant byte address 0x4 - core index']
  #allocation1 [shape = 'u32[144,128]{1,0:T(1,128)}', space=vmem, size = 0x12000, scoped, tag = 'internal scratch']
  #allocation2 [shape = 's32[1]{0}', space=sflag, size = 0x4, scoped, tag = 'scoped memory for tpu_custom_call.1']
  #allocation3 [shape = 'u8[512]{0}', space=smem, size = 0x200, scoped, tag = 'prefetched SMEM operand 0']
  #allocation4 [shape = 'u8[512]{0}', space=smem, size = 0x200, scoped, tag = 'prefetched SMEM operand 1']
  %s0 = inlined_call_operand.hbm [shape: s32[16], index: 0, kind: input, shape index: {}]
  %s1 = inlined_call_operand.vmem [shape: s32[16], index: 1, kind: input, shape index: {}]
  %s2 = inlined_call_operand.hbm [shape: f32[64,128], index: 2, kind: input, shape index: {}]
  %s3 = inlined_call_operand.hbm [shape: f32[16,128], index: 3, kind: output, shape index: {}]
  %s4 = sld [smem:[#allocation0]]
  $region41: #{tpu_custom_call.1} parent=0
    _
  %s6 = ssub.s32 1, %s4
  %s7 = scalar_select 0, %s6, %s4
  %9 = dma.hbm_to_smem %s0, 16, [#allocation3], [#allocation2]
  %s10 = sshll.u32 %s1, 4
  %s11 = int_to_ptr.vmem [resolvable:$true] %s10
  %13 = dma.vmem_to_smem %s11, 16, [#allocation4], [#allocation2]
  %14 = dma.done [#allocation2], 32
  %15 = sfence
  $region1: #{tpu_custom_call.1} parent=0
    #allocation5 [shape = 'u8[32768]{0}', space=vmem, size = 0x8000, scoped, tag = 'input window, operand 2, single buffered']
    #allocation6 [shape = 's32[2]{0}', space=sflag, size = 0x8, scoped, tag = 'scoped memory for tpu_custom_call.1']
    #allocation7 [shape = 's32[2]{0}', space=sflag, size = 0x8, scoped, tag = 'scoped memory for tpu_custom_call.1']
    #allocation8 [shape = 'u8[8192]{0}', space=vmem, size = 0x2000, scoped, tag = 'output window, operand 0']
    %16 = vsyncpa [#allocation6], 0
    %17 = vsyncpa [#allocation7], 0
    %s18 = scalar_lea.sflag [#allocation7], 1
    %19 = vsyncpa %s18, 0
    loop: start=0, step=1, limit=4
    $region2: #{tpu_custom_call.1} parent=1 // loop_pre_header
      _
    $region3: #{tpu_custom_call.1} parent=1 // loop_header
      %s21 = sphi 0, %s25
      %p22 = scmp.ge.s32.totalorder %s21, 4
      %s29 = sphi 0, %s29
      %s31 = sphi 0, %s29
      %s32 = sphi 0, %s31
      %s46 = sphi 0, %s32
      %s52 = sphi 0, %s54
      %s55 = sphi 0, %s52
      %s56 = sphi 0, %s55
      %s72 = sphi 0, %s56
    $region4: #{tpu_custom_call.1} parent=1 // loop_header_branch
      %24 = sbr.rel (%p22) target = $region8
    $region5: #{tpu_custom_call.1} parent=1 // loop_body
      %s26 = ssub.s32 %s21, 1
      %s27 = ssub.s32 %s21, 2
      %s28 = sadd.s32 %s21, 1
      %s30 = sadd.s32 %s29, 1
      %p33 = scmp.eq.s32.totalorder %s21, 1
      %p34 = scmp.ne.s32.totalorder %s29, %s31
      %p35 = scmp.eq.s32.totalorder %s21, 0
      %p36 = por %p34, %p35
      %p37 = scmp.ne.s32.totalorder %s29, %s31
      %p38 = scmp.eq.s32.totalorder %s26, 1
      %p39 = por %p37, %p38
      %p40 = scmp.ne.s32.totalorder %s31, %s32
      %p41 = scmp.eq.s32.totalorder %s26, 0
      %p42 = por %p40, %p41
      %p43 = scmp.ne.s32.totalorder %s31, %s32
      %p44 = scmp.eq.s32.totalorder %s27, 1
      %p45 = por %p43, %p44
      %p47 = scmp.ne.s32.totalorder %s32, %s46
      %p48 = scmp.eq.s32.totalorder %s27, 0
      %p49 = por %p47, %p48
      %s50 = ssub.s32 %s21, %s28
      %p51 = scmp.eq.s32.totalorder %s50, 0
      %s53 = sadd.s32 %s52, 1
      %s54 = scalar_select %p51, %s52, %s53
      %p57 = pneg %p51
      %p58 = scmp.eq.s32.totalorder %s21, 1
      %p59 = por %p57, %p58
      %p60 = scmp.ne.s32.totalorder %s52, %s55
      %p61 = scmp.eq.s32.totalorder %s21, 0
      %p62 = por %p60, %p61
      %p63 = scmp.ne.s32.totalorder %s52, %s55
      %p64 = scmp.eq.s32.totalorder %s26, 1
      %p65 = por %p63, %p64
      %p66 = scmp.ne.s32.totalorder %s55, %s56
      %p67 = scmp.eq.s32.totalorder %s26, 0
      %p68 = por %p66, %p67
      %p69 = scmp.ne.s32.totalorder %s55, %s56
      %p70 = scmp.eq.s32.totalorder %s27, 1
      %p71 = por %p69, %p70
      %p73 = scmp.ne.s32.totalorder %s56, %s72
      %p74 = scmp.eq.s32.totalorder %s27, 0
      %p75 = por %p73, %p74
      %p76 = scmp.le.s32.totalorder 1, %s21
      %p77 = scmp.lt.s32.totalorder %s21, 3
      %p78 = pnand %p76, %p77
      %p79 = pneg %p78
      // Predicated region
      $region9: #{tpu_custom_call.1} parent=5 // pred_check
        _
      $region10: #{tpu_custom_call.1} parent=5 // pred_check_branch
        %81 = sbr.rel (%p78) target = $region12
      $region11: #{tpu_custom_call.1} parent=5 // pred_region
        %s82 = ssub.s32 %s21, 1
        // Predicated region
        $region13: #{tpu_custom_call.1} parent=11 // pred_check
          %p83 = pneg %p42
        $region14: #{tpu_custom_call.1} parent=11 // pred_check_branch
          %85 = sbr.rel (%p83) target = $region16
        $region15: #{tpu_custom_call.1} parent=11 // pred_region
          %s87 = ssub.s32 1024, 1024
          %88 = vsyncadd [#allocation6], %s87
          %s89 = sshll.u32 [#allocation5], 4
          %s90 = int_to_ptr.vmem [resolvable:$true] %s89
          %95 = dma.hbm_to_vmem [thread:$0]  %s2, 1024, %s90, [#allocation6], 128, 128, 8
        $region16: #{tpu_custom_call.1} parent=11 // pred_fallthru
          _
      $region12: #{tpu_custom_call.1} parent=5 // pred_fallthru
        _
      %p96 = scmp.lt.s32.totalorder %s21, 2
      // Predicated region
      $region17: #{tpu_custom_call.1} parent=5 // pred_check
        %p97 = pneg %p96
      $region18: #{tpu_custom_call.1} parent=5 // pred_check_branch
        %99 = sbr.rel (%p97) target = $region20
      $region19: #{tpu_custom_call.1} parent=5 // pred_region
        _
      $region20: #{tpu_custom_call.1} parent=5 // pred_fallthru
        _
      %p100 = scmp.le.s32.totalorder 1, %s21
      %p101 = scmp.lt.s32.totalorder %s21, 3
      %p102 = pnand %p100, %p101
      %p103 = pneg %p102
      // Predicated region
      $region21: #{tpu_custom_call.1} parent=5 // pred_check
        _
      $region22: #{tpu_custom_call.1} parent=5 // pred_check_branch
        %105 = sbr.rel (%p102) target = $region24
      $region23: #{tpu_custom_call.1} parent=5 // pred_region
        %s106 = ssub.s32 %s21, 1
        // Predicated region
        $region25: #{tpu_custom_call.1} parent=23 // pred_check
          %p107 = pneg %p42
        $region26: #{tpu_custom_call.1} parent=23 // pred_check_branch
          %109 = sbr.rel (%p107) target = $region28
        $region27: #{tpu_custom_call.1} parent=23 // pred_region
          %110 = dma.done [#allocation6], 1024
        $region28: #{tpu_custom_call.1} parent=23 // pred_fallthru
          _
        %p111 = pneg %p42
        %p112 = pneg %p39
        %p113 = pneg %p68
        %p114 = pneg %p65
        %s115 = sand.u32 %s55, 1
        %s116 = scalar_lea.sflag [#allocation7], %s115
        %s117 = sand.u32 %s55, 1
        %s118 = smul.addr %s117, 8
        %s119 = scalar_lea.vmem [#allocation8], %s118
        %s120 = smul.u32 %s26, 8
        %s121 = sld [smem:[#allocation3 + %s120]]
        %s122 = sld [smem:[#allocation4 + %s120]]
        %p123 = scmp.ne.s32.totalorder %s122, 0
        %s124 = scalar_select %p123, 1, 0
        %s125 = scvt.s32.f32 %s124
        %s126 = scalar_lea.vmem [#allocation5], %s121
        %v127 = vld [vmem:[%s126] sm:$0x1]
        %v128 = vstv %s125
        %v129 = vmul.f32 %v127, %v128
        %130 = vst [vmem:[%s119] sm:$0x1] %v129
        %s131 = sadd.s32 %s120, 1
        %s132 = sld [smem:[#allocation3 + %s131]]
        %s133 = sld [smem:[#allocation4 + %s131]]
        %p134 = scmp.ne.s32.totalorder %s133, 0
        %s135 = scalar_select %p134, 1, 0
        %s136 = scvt.s32.f32 %s135
        %s137 = scalar_lea.vmem [#allocation5], %s132
        %v138 = vld [vmem:[%s137] sm:$0x1]
        %v139 = vstv %s136
        %v140 = vmul.f32 %v138, %v139
        %141 = vst [vmem:[%s119 + $0x1] sm:$0x1] %v140
        %s142 = sadd.s32 %s120, 2
        %s143 = sld [smem:[#allocation3 + %s142]]
        %s144 = sld [smem:[#allocation4 + %s142]]
        %p145 = scmp.ne.s32.totalorder %s144, 0
        %s146 = scalar_select %p145, 1, 0
        %s147 = scvt.s32.f32 %s146
        %s148 = scalar_lea.vmem [#allocation5], %s143
        %v149 = vld [vmem:[%s148] sm:$0x1]
        %v150 = vstv %s147
        %v151 = vmul.f32 %v149, %v150
        %152 = vst [vmem:[%s119 + $0x2] sm:$0x1] %v151
        %s153 = sadd.s32 %s120, 3
        %s154 = sld [smem:[#allocation3 + %s153]]
        %s155 = sld [smem:[#allocation4 + %s153]]
        %p156 = scmp.ne.s32.totalorder %s155, 0
        %s157 = scalar_select %p156, 1, 0
        %s158 = scvt.s32.f32 %s157
        %s159 = scalar_lea.vmem [#allocation5], %s154
        %v160 = vld [vmem:[%s159] sm:$0x1]
        %v161 = vstv %s158
        %v162 = vmul.f32 %v160, %v161
        %163 = vst [vmem:[%s119 + $0x3] sm:$0x1] %v162
        %s164 = sadd.s32 %s120, 4
        %s165 = sld [smem:[#allocation3 + %s164]]
        %s166 = sld [smem:[#allocation4 + %s164]]
        %p167 = scmp.ne.s32.totalorder %s166, 0
        %s168 = scalar_select %p167, 1, 0
        %s169 = scvt.s32.f32 %s168
        %s170 = scalar_lea.vmem [#allocation5], %s165
        %v171 = vld [vmem:[%s170] sm:$0x1]
        %v172 = vstv %s169
        %v173 = vmul.f32 %v171, %v172
        %174 = vst [vmem:[%s119 + $0x4] sm:$0x1] %v173
        %s175 = sadd.s32 %s120, 5
        %s176 = sld [smem:[#allocation3 + %s175]]
        %s177 = sld [smem:[#allocation4 + %s175]]
        %p178 = scmp.ne.s32.totalorder %s177, 0
        %s179 = scalar_select %p178, 1, 0
        %s180 = scvt.s32.f32 %s179
        %s181 = scalar_lea.vmem [#allocation5], %s176
        %v182 = vld [vmem:[%s181] sm:$0x1]
        %v183 = vstv %s180
        %v184 = vmul.f32 %v182, %v183
        %185 = vst [vmem:[%s119 + $0x5] sm:$0x1] %v184
        %s186 = sadd.s32 %s120, 6
        %s187 = sld [smem:[#allocation3 + %s186]]
        %s188 = sld [smem:[#allocation4 + %s186]]
        %p189 = scmp.ne.s32.totalorder %s188, 0
        %s190 = scalar_select %p189, 1, 0
        %s191 = scvt.s32.f32 %s190
        %s192 = scalar_lea.vmem [#allocation5], %s187
        %v193 = vld [vmem:[%s192] sm:$0x1]
        %v194 = vstv %s191
        %v195 = vmul.f32 %v193, %v194
        %196 = vst [vmem:[%s119 + $0x6] sm:$0x1] %v195
        %s197 = sadd.s32 %s120, 7
        %s198 = sld [smem:[#allocation3 + %s197]]
        %s199 = sld [smem:[#allocation4 + %s197]]
        %p200 = scmp.ne.s32.totalorder %s199, 0
        %s201 = scalar_select %p200, 1, 0
        %s202 = scvt.s32.f32 %s201
        %s203 = scalar_lea.vmem [#allocation5], %s198
        %v204 = vld [vmem:[%s203] sm:$0x1]
        %v205 = vstv %s202
        %v206 = vmul.f32 %v204, %v205
        %207 = vst [vmem:[%s119 + $0x7] sm:$0x1] %v206
        %s208 = sand.u32 %s55, 1
        %s209 = scalar_lea.sflag [#allocation7], %s208
        %s210 = sand.u32 %s55, 1
        %s211 = smul.addr %s210, 8
        %s212 = scalar_lea.vmem [#allocation8], %s211
        // Predicated region
        $region29: #{tpu_custom_call.1} parent=23 // pred_check
          %p213 = pneg %p65
        $region30: #{tpu_custom_call.1} parent=23 // pred_check_branch
          %215 = sbr.rel (%p213) target = $region32
        $region31: #{tpu_custom_call.1} parent=23 // pred_region
          %s217 = ssub.s32 128, 128
          %218 = vsyncadd %s209, %s217
          %s219 = smul.addr %s26, 128
          %s220 = scalar_lea.hbm %s3, %s219
          %s222 = sshll.u32 %s212, 4
          %s223 = int_to_ptr.vmem [resolvable:$true] %s222
          %225 = dma.vmem_to_hbm [thread:$0]  %s223, 128, %s220, %s209
        $region32: #{tpu_custom_call.1} parent=23 // pred_fallthru
          _
      $region24: #{tpu_custom_call.1} parent=5 // pred_fallthru
        _
      %p226 = scmp.le.s32.totalorder 2, %s21
      // Predicated region
      $region33: #{tpu_custom_call.1} parent=5 // pred_check
        %p227 = pneg %p226
      $region34: #{tpu_custom_call.1} parent=5 // pred_check_branch
        %229 = sbr.rel (%p227) target = $region36
      $region35: #{tpu_custom_call.1} parent=5 // pred_region
        %s230 = ssub.s32 %s21, 2
        // Predicated region
        $region37: #{tpu_custom_call.1} parent=35 // pred_check
          %p231 = pneg %p71
        $region38: #{tpu_custom_call.1} parent=35 // pred_check_branch
          %233 = sbr.rel (%p231) target = $region40
        $region39: #{tpu_custom_call.1} parent=35 // pred_region
          %s234 = sand.u32 %s56, 1
          %s235 = scalar_lea.sflag [#allocation7], %s234
          %s236 = sand.u32 %s56, 1
          %s237 = smul.addr %s236, 8
          %s238 = scalar_lea.vmem [#allocation8], %s237
          %239 = dma.done %s235, 128
        $region40: #{tpu_custom_call.1} parent=35 // pred_fallthru
          _
      $region36: #{tpu_custom_call.1} parent=5 // pred_fallthru
        _
    $region6: #{tpu_custom_call.1} parent=1 // loop_footer
      %s25 = sadd.s32 1, %s21
    $region7: #{tpu_custom_call.1} parent=1 // loop_footer_branch
      %20 = sbr.rel target = $region3
    $region8: #{tpu_custom_call.1} parent=1 // loop_exit
      _
    %240 = vsyncpa [#allocation6], 1
    %s241 = scalar_lea.sflag [#allocation6], 1
    %242 = vsyncpa %s241, 1
    %243 = vsyncpa [#allocation7], 1
    %s244 = scalar_lea.sflag [#allocation7], 1
    %245 = vsyncpa %s244, 1

</llo_original>
